<compile_context>
chip_gen: v7x
topology: tpu7x:2x2x1
jax: 0.10.0
libtpu: 0.0.40
codegen_flags: <defaults>
</compile_context>

<pallas_src>
import jax
import jax.numpy as jnp
from jax import lax
from jax.experimental import pallas as pl
from jax.experimental.pallas import tpu as pltpu


def _fusion_kernel(rgb_ref, dep_ref, wr_ref, wd_ref, b_ref, o_ref):
    # rgb_ref / dep_ref: (C_in, THW)   wr/wd: (C_out, C_in)
    # b_ref: (C_out, 1)                o_ref: (C_out, THW)
    acc = jnp.dot(wr_ref[...], rgb_ref[...], preferred_element_type=jnp.float32)
    acc = acc + jnp.dot(wd_ref[...], dep_ref[...], preferred_element_type=jnp.float32)
    acc = acc + b_ref[...].astype(jnp.float32)      # (C_out, 1) broadcasts over lanes
    o_ref[...] = acc.astype(o_ref.dtype)


def _pick_hw_tile(N, HW, C_in, C_out, itemsize):
    """Largest multiple of 128 dividing HW whose double-buffered blocks fit ~20 MiB."""
    if HW % 128 != 0:
        return HW  # full-extent block along the lane dim (allowed by Pallas)
    # Sublane padding of the channel (second-to-last) dim: 8 rows for 4-byte
    # dtypes, 16 for 2-byte, 32 for 1-byte.
    sub = 8 * max(1, 4 // itemsize)
    rows_in = -(-C_in // sub) * sub
    rows_out = -(-C_out // sub) * sub
    # Per lane column: rgb + dep + out blocks, x2 for Pallas double-buffering.
    bytes_per_lane = 2 * (2 * rows_in + rows_out) * itemsize
    budget = 20 << 20  # leaves headroom under v7x's 32 MiB scoped / 64 MiB physical
    max_thw = max(128, (budget // bytes_per_lane) // 128 * 128)
    thw = min(HW, max_thw)
    while HW % thw != 0:
        thw -= 128
    # Guarantee >= 2 grid steps so both megacore TensorCores get work (N==1 case).
    while N * (HW // thw) < 2 and thw > 128 and thw % 256 == 0:
        thw //= 2
    return thw


def cross_modal_fusion(rgb, dep, weight, bias):
    """rgb, dep: (N, C_in, H, W); weight: (C_out, 2*C_in, 1, 1); bias: (C_out,)."""
    N, C_in, H, W = rgb.shape
    C_out = weight.shape[0]
    HW = H * W

    # Split the 1x1-conv weight into rgb / depth halves (avoids the concat).
    w = weight.reshape(C_out, 2 * C_in).astype(rgb.dtype)
    w_rgb = w[:, :C_in]
    w_dep = w[:, C_in:]
    b = bias.reshape(C_out, 1).astype(jnp.float32)

    # Lane-dense layout: trailing dim = H*W.
    rgb2 = rgb.reshape(N, C_in, HW)
    dep2 = dep.reshape(N, C_in, HW)

    THW = _pick_hw_tile(N, HW, C_in, C_out, rgb.dtype.itemsize)
    grid = (N, HW // THW)

    out = pl.pallas_call(
        _fusion_kernel,
        out_shape=jax.ShapeDtypeStruct((N, C_out, HW), rgb.dtype),
        grid_spec=pltpu.PrefetchScalarGridSpec(
            num_scalar_prefetch=0,
            grid=grid,
            in_specs=[
                pl.BlockSpec((None, C_in, THW), lambda n, s: (n, 0, s)),
                pl.BlockSpec((None, C_in, THW), lambda n, s: (n, 0, s)),
                pl.BlockSpec((C_out, C_in), lambda n, s: (0, 0)),
                pl.BlockSpec((C_out, C_in), lambda n, s: (0, 0)),
                pl.BlockSpec((C_out, 1), lambda n, s: (0, 0)),
            ],
            out_specs=pl.BlockSpec((None, C_out, THW), lambda n, s: (n, 0, s)),
        ),
        compiler_params=pltpu.CompilerParams(
            dimension_semantics=("parallel", "parallel"),
            vmem_limit_bytes=48 * 1024 * 1024,
        ),
    )(rgb2, dep2, w_rgb, w_dep, b)
    return out.reshape(N, C_out, H, W)


def _reference(rgb, dep, weight, bias):
    x = jnp.concatenate([rgb, dep], axis=1)
    out = lax.conv_general_dilated(
        x, weight,
        window_strides=(1, 1),
        padding="VALID",
        dimension_numbers=("NCHW", "OIHW", "NCHW"),
    )
    return out + bias.reshape(1, -1, 1, 1)


if __name__ == "__main__":
    key = jax.random.PRNGKey(0)
    k_rgb, k_dep, k_w, k_b = jax.random.split(key, 4)

    N, C_in, H, W = 2, 4, 16, 16
    C_out = 8

    rgb = jax.random.normal(k_rgb, (N, C_in, H, W), dtype=jnp.float32)
    dep = jax.random.normal(k_dep, (N, C_in, H, W), dtype=jnp.float32)

    # Conv2d(2*C_in, C_out, 1) default init: uniform(-1/sqrt(fan_in), 1/sqrt(fan_in)).
    fan_in = 2 * C_in
    bound = 1.0 / jnp.sqrt(fan_in)
    weight = jax.random.uniform(
        k_w, (C_out, 2 * C_in, 1, 1), minval=-bound, maxval=bound, dtype=jnp.float32)
    bias = jax.random.uniform(
        k_b, (C_out,), minval=-bound, maxval=bound, dtype=jnp.float32)

    out = cross_modal_fusion(rgb, dep, weight, bias)
    out = jax.block_until_ready(out)

    ref = _reference(rgb, dep, weight, bias)
    assert out.shape == (N, C_out, H, W)
    assert jnp.allclose(out, ref, atol=1e-5, rtol=1e-5)

    print("KERNEL_OK")
</pallas_src>

<mosaic_0001>
module attributes {stable_mosaic.version = 11 : i64} {
  func.func @_fusion_kernel(%arg0: i32, %arg1: i32, %arg2: memref<1x4x256xf32, #tpu.memory_space<vmem>>, %arg3: memref<1x4x256xf32, #tpu.memory_space<vmem>>, %arg4: memref<8x4xf32, #tpu.memory_space<vmem>>, %arg5: memref<8x4xf32, #tpu.memory_space<vmem>>, %arg6: memref<8x1xf32, #tpu.memory_space<vmem>>, %arg7: memref<1x8x256xf32, #tpu.memory_space<vmem>>) attributes {dimension_semantics = [#tpu.dimension_semantics<parallel>, #tpu.dimension_semantics<parallel>], iteration_bounds = array<i64: 2, 1>, scalar_prefetch = 0 : i64, scratch_operands = 0 : i64, tpu.core_type = #tpu.core_type<tc>, window_params = [{transform_indices = @transform_0, window_bounds = array<i64: 1, 4, 256>}, {transform_indices = @transform_1, window_bounds = array<i64: 1, 4, 256>}, {pipeline_mode = #tpu.pipeline_mode<synchronous>, transform_indices = @transform_2, window_bounds = array<i64: 8, 4>}, {pipeline_mode = #tpu.pipeline_mode<synchronous>, transform_indices = @transform_3, window_bounds = array<i64: 8, 4>}, {pipeline_mode = #tpu.pipeline_mode<synchronous>, transform_indices = @transform_4, window_bounds = array<i64: 8, 1>}, {transform_indices = @transform_5, window_bounds = array<i64: 1, 8, 256>}]} {
    %c0 = arith.constant 0 : index
    %c0_0 = arith.constant 0 : index
    %0 = vector.load %arg4[%c0, %c0_0] : memref<8x4xf32, #tpu.memory_space<vmem>>, vector<8x4xf32>
    %c0_1 = arith.constant 0 : index
    %c0_2 = arith.constant 0 : index
    %c0_3 = arith.constant 0 : index
    %1 = vector.load %arg2[%c0_1, %c0_2, %c0_3] : memref<1x4x256xf32, #tpu.memory_space<vmem>>, vector<1x4x256xf32>
    %2 = vector.shape_cast %1 : vector<1x4x256xf32> to vector<4x256xf32>
    %cst = arith.constant dense<0.000000e+00> : vector<8x256xf32>
    %3 = tpu.matmul %0, %2, %cst {dimension_numbers = #tpu.dot_dimension_numbers<[1], [0], [0], [1], [0, 0, 1, 1], [], []>} : vector<8x4xf32>, vector<4x256xf32>, vector<8x256xf32> -> vector<8x256xf32>
    %c0_4 = arith.constant 0 : index
    %c0_5 = arith.constant 0 : index
    %4 = vector.load %arg5[%c0_4, %c0_5] : memref<8x4xf32, #tpu.memory_space<vmem>>, vector<8x4xf32>
    %c0_6 = arith.constant 0 : index
    %c0_7 = arith.constant 0 : index
    %c0_8 = arith.constant 0 : index
    %5 = vector.load %arg3[%c0_6, %c0_7, %c0_8] : memref<1x4x256xf32, #tpu.memory_space<vmem>>, vector<1x4x256xf32>
    %6 = vector.shape_cast %5 : vector<1x4x256xf32> to vector<4x256xf32>
    %cst_9 = arith.constant dense<0.000000e+00> : vector<8x256xf32>
    %7 = tpu.matmul %4, %6, %cst_9 {dimension_numbers = #tpu.dot_dimension_numbers<[1], [0], [0], [1], [0, 0, 1, 1], [], []>} : vector<8x4xf32>, vector<4x256xf32>, vector<8x256xf32> -> vector<8x256xf32>
    %8 = arith.addf %3, %7 : vector<8x256xf32>
    %c0_10 = arith.constant 0 : index
    %c0_11 = arith.constant 0 : index
    %9 = vector.load %arg6[%c0_10, %c0_11] : memref<8x1xf32, #tpu.memory_space<vmem>>, vector<8x1xf32>
    %10 = vector.broadcast %9 : vector<8x1xf32> to vector<8x256xf32>
    %11 = arith.addf %8, %10 : vector<8x256xf32>
    %c0_12 = arith.constant 0 : index
    %c0_13 = arith.constant 0 : index
    %c0_14 = arith.constant 0 : index
    %12 = vector.load %arg7[%c0_12, %c0_13, %c0_14] : memref<1x8x256xf32, #tpu.memory_space<vmem>>, vector<1x8x256xf32>
    %13 = vector.shape_cast %12 : vector<1x8x256xf32> to vector<8x256xf32>
    %14 = vector.shape_cast %11 : vector<8x256xf32> to vector<1x8x256xf32>
    tpu.vector_store %arg7[%c0_12, %c0_13, %c0_14], %14 {strides = array<i32>} : memref<1x8x256xf32, #tpu.memory_space<vmem>>, vector<1x8x256xf32>,
    return
  }
  func.func @transform_0(%arg0: i32, %arg1: i32) -> (i32, i32, i32) {
    %c0_i32 = arith.constant 0 : i32
    %c0_i32_0 = arith.constant 0 : i32
    return %arg0, %c0_i32, %arg1 : i32, i32, i32
  }
  func.func @transform_1(%arg0: i32, %arg1: i32) -> (i32, i32, i32) {
    %c0_i32 = arith.constant 0 : i32
    %c0_i32_0 = arith.constant 0 : i32
    return %arg0, %c0_i32, %arg1 : i32, i32, i32
  }
  func.func @transform_2(%arg0: i32, %arg1: i32) -> (i32, i32) {
    %c0_i32 = arith.constant 0 : i32
    %c0_i32_0 = arith.constant 0 : i32
    %c0_i32_1 = arith.constant 0 : i32
    return %c0_i32, %c0_i32_0 : i32, i32
  }
  func.func @transform_3(%arg0: i32, %arg1: i32) -> (i32, i32) {
    %c0_i32 = arith.constant 0 : i32
    %c0_i32_0 = arith.constant 0 : i32
    %c0_i32_1 = arith.constant 0 : i32
    return %c0_i32, %c0_i32_0 : i32, i32
  }
  func.func @transform_4(%arg0: i32, %arg1: i32) -> (i32, i32) {
    %c0_i32 = arith.constant 0 : i32
    %c0_i32_0 = arith.constant 0 : i32
    %c0_i32_1 = arith.constant 0 : i32
    return %c0_i32, %c0_i32_0 : i32, i32
  }
  func.func @transform_5(%arg0: i32, %arg1: i32) -> (i32, i32, i32) {
    %c0_i32 = arith.constant 0 : i32
    %c0_i32_0 = arith.constant 0 : i32
    return %arg0, %c0_i32, %arg1 : i32, i32, i32
  }
}

</mosaic_0001>

<llo_original>
// kernel: tpu_custom_call.1
$region0: #{tpu_custom_call.1}
  #allocation0 [shape = 'u32[]', space=smem, size = 0x4, offset = 0x4, fixed_abs, tag = 'smem constant byte address 0x4 - core index']
  #allocation1 [shape = 'u32[144,128]{1,0:T(1,128)}', space=vmem, size = 0x12000, scoped, tag = 'internal scratch']
  %s0 = inlined_call_operand.vmem [shape: f32[2,4,256], index: 0, kind: input, shape index: {}]
  %s1 = inlined_call_operand.vmem [shape: f32[2,4,256], index: 1, kind: input, shape index: {}]
  %s2 = inlined_call_operand.vmem [shape: f32[8,4], index: 2, kind: input, shape index: {}]
  %s3 = inlined_call_operand.vmem [shape: f32[8,4], index: 3, kind: input, shape index: {}]
  %s4 = inlined_call_operand.vmem [shape: f32[8,1], index: 4, kind: input, shape index: {}]
  %s5 = inlined_call_operand.hbm [shape: f32[2,8,256], index: 5, kind: output, shape index: {}]
  %s6 = sld [smem:[#allocation0]]
  $region53: #{tpu_custom_call.1} parent=0
    _
  %s8 = ssub.s32 1, %s6
  %s9 = scalar_select 0, %s8, %s6
  $region1: #{tpu_custom_call.1} parent=0
    #allocation2 [shape = 'u8[16384]{0}', space=vmem, size = 0x4000, scoped, tag = 'output window, operand 0']
    #allocation3 [shape = 's32[2]{0}', space=sflag, size = 0x8, scoped, tag = 'scoped memory for tpu_custom_call.1']
    %10 = vsyncpa [#allocation3], 0
    %s11 = scalar_lea.sflag [#allocation3], 1
    %12 = vsyncpa %s11, 0
    loop: start=0, step=1, limit=4
    $region2: #{tpu_custom_call.1} parent=1 // loop_pre_header
      _
    $region3: #{tpu_custom_call.1} parent=1 // loop_header
      %s14 = sphi 0, %s18
      %p15 = scmp.ge.s32.totalorder %s14, 4
      %s21 = sphi 0, %s33
      %s22 = sphi 0, %s29
      %s23 = sphi 0, %s21
      %s24 = sphi 0, %s22
      %s25 = sphi 0, %s23
      %s26 = sphi 0, %s24
      %s38 = sphi 0, %s40
      %s41 = sphi 0, %s38
      %s42 = sphi 0, %s41
      %s58 = sphi 0, %s42
      %s66 = sphi 0, %s68
      %s69 = sphi 0, %s66
      %s70 = sphi 0, %s69
      %s86 = sphi 0, %s70
      %s90 = sphi 0, %s90
      %s92 = sphi 0, %s90
      %s93 = sphi 0, %s92
      %s107 = sphi 0, %s93
      %s111 = sphi 0, %s111
      %s113 = sphi 0, %s111
      %s114 = sphi 0, %s113
      %s128 = sphi 0, %s114
      %s132 = sphi 0, %s132
      %s134 = sphi 0, %s132
      %s135 = sphi 0, %s134
      %s149 = sphi 0, %s135
      %s157 = sphi 0, %s159
      %s160 = sphi 0, %s157
      %s161 = sphi 0, %s160
      %s177 = sphi 0, %s161
    $region4: #{tpu_custom_call.1} parent=1 // loop_header_branch
      %17 = sbr.rel (%p15) target = $region8
    $region5: #{tpu_custom_call.1} parent=1 // loop_body
      %s19 = ssub.s32 %s14, 1
      %s20 = ssub.s32 %s14, 2
      %s27 = sadd.s32 1, %s22
      %p28 = scmp.ge.s32.totalorder %s27, 1
      %s29 = scalar_select %p28, 0, %s27
      %s30 = sadd.s32 1, %s21
      %s31 = scalar_select %p28, %s30, %s21
      %p32 = scmp.ge.s32.totalorder %s31, 2
      %s33 = scalar_select %p32, 0, %s31
      %s34 = ssub.s32 %s21, %s33
      %s35 = ssub.s32 %s22, %s29
      %s36 = sor.u32 %s34, %s35
      %p37 = scmp.eq.s32.totalorder %s36, 0
      %s39 = sadd.s32 %s38, 1
      %s40 = scalar_select %p37, %s38, %s39
      %p43 = pneg %p37
      %p44 = scmp.eq.s32.totalorder %s14, 1
      %p45 = por %p43, %p44
      %p46 = scmp.ne.s32.totalorder %s38, %s41
      %p47 = scmp.eq.s32.totalorder %s14, 0
      %p48 = por %p46, %p47
      %p49 = scmp.ne.s32.totalorder %s38, %s41
      %p50 = scmp.eq.s32.totalorder %s19, 1
      %p51 = por %p49, %p50
      %p52 = scmp.ne.s32.totalorder %s41, %s42
      %p53 = scmp.eq.s32.totalorder %s19, 0
      %p54 = por %p52, %p53
      %p55 = scmp.ne.s32.totalorder %s41, %s42
      %p56 = scmp.eq.s32.totalorder %s20, 1
      %p57 = por %p55, %p56
      %p59 = scmp.ne.s32.totalorder %s42, %s58
      %p60 = scmp.eq.s32.totalorder %s20, 0
      %p61 = por %p59, %p60
      %s62 = ssub.s32 %s21, %s33
      %s63 = ssub.s32 %s22, %s29
      %s64 = sor.u32 %s62, %s63
      %p65 = scmp.eq.s32.totalorder %s64, 0
      %s67 = sadd.s32 %s66, 1
      %s68 = scalar_select %p65, %s66, %s67
      %p71 = pneg %p65
      %p72 = scmp.eq.s32.totalorder %s14, 1
      %p73 = por %p71, %p72
      %p74 = scmp.ne.s32.totalorder %s66, %s69
      %p75 = scmp.eq.s32.totalorder %s14, 0
      %p76 = por %p74, %p75
      %p77 = scmp.ne.s32.totalorder %s66, %s69
      %p78 = scmp.eq.s32.totalorder %s19, 1
      %p79 = por %p77, %p78
      %p80 = scmp.ne.s32.totalorder %s69, %s70
      %p81 = scmp.eq.s32.totalorder %s19, 0
      %p82 = por %p80, %p81
      %p83 = scmp.ne.s32.totalorder %s69, %s70
      %p84 = scmp.eq.s32.totalorder %s20, 1
      %p85 = por %p83, %p84
      %p87 = scmp.ne.s32.totalorder %s70, %s86
      %p88 = scmp.eq.s32.totalorder %s20, 0
      %p89 = por %p87, %p88
      %s91 = sadd.s32 %s90, 1
      %p94 = scmp.eq.s32.totalorder %s14, 1
      %p95 = scmp.ne.s32.totalorder %s90, %s92
      %p96 = scmp.eq.s32.totalorder %s14, 0
      %p97 = por %p95, %p96
      %p98 = scmp.ne.s32.totalorder %s90, %s92
      %p99 = scmp.eq.s32.totalorder %s19, 1
      %p100 = por %p98, %p99
      %p101 = scmp.ne.s32.totalorder %s92, %s93
      %p102 = scmp.eq.s32.totalorder %s19, 0
      %p103 = por %p101, %p102
      %p104 = scmp.ne.s32.totalorder %s92, %s93
      %p105 = scmp.eq.s32.totalorder %s20, 1
      %p106 = por %p104, %p105
      %p108 = scmp.ne.s32.totalorder %s93, %s107
      %p109 = scmp.eq.s32.totalorder %s20, 0
      %p110 = por %p108, %p109
      %s112 = sadd.s32 %s111, 1
      %p115 = scmp.eq.s32.totalorder %s14, 1
      %p116 = scmp.ne.s32.totalorder %s111, %s113
      %p117 = scmp.eq.s32.totalorder %s14, 0
      %p118 = por %p116, %p117
      %p119 = scmp.ne.s32.totalorder %s111, %s113
      %p120 = scmp.eq.s32.totalorder %s19, 1
      %p121 = por %p119, %p120
      %p122 = scmp.ne.s32.totalorder %s113, %s114
      %p123 = scmp.eq.s32.totalorder %s19, 0
      %p124 = por %p122, %p123
      %p125 = scmp.ne.s32.totalorder %s113, %s114
      %p126 = scmp.eq.s32.totalorder %s20, 1
      %p127 = por %p125, %p126
      %p129 = scmp.ne.s32.totalorder %s114, %s128
      %p130 = scmp.eq.s32.totalorder %s20, 0
      %p131 = por %p129, %p130
      %s133 = sadd.s32 %s132, 1
      %p136 = scmp.eq.s32.totalorder %s14, 1
      %p137 = scmp.ne.s32.totalorder %s132, %s134
      %p138 = scmp.eq.s32.totalorder %s14, 0
      %p139 = por %p137, %p138
      %p140 = scmp.ne.s32.totalorder %s132, %s134
      %p141 = scmp.eq.s32.totalorder %s19, 1
      %p142 = por %p140, %p141
      %p143 = scmp.ne.s32.totalorder %s134, %s135
      %p144 = scmp.eq.s32.totalorder %s19, 0
      %p145 = por %p143, %p144
      %p146 = scmp.ne.s32.totalorder %s134, %s135
      %p147 = scmp.eq.s32.totalorder %s20, 1
      %p148 = por %p146, %p147
      %p150 = scmp.ne.s32.totalorder %s135, %s149
      %p151 = scmp.eq.s32.totalorder %s20, 0
      %p152 = por %p150, %p151
      %s153 = ssub.s32 %s21, %s33
      %s154 = ssub.s32 %s22, %s29
      %s155 = sor.u32 %s153, %s154
      %p156 = scmp.eq.s32.totalorder %s155, 0
      %s158 = sadd.s32 %s157, 1
      %s159 = scalar_select %p156, %s157, %s158
      %p162 = pneg %p156
      %p163 = scmp.eq.s32.totalorder %s14, 1
      %p164 = por %p162, %p163
      %p165 = scmp.ne.s32.totalorder %s157, %s160
      %p166 = scmp.eq.s32.totalorder %s14, 0
      %p167 = por %p165, %p166
      %p168 = scmp.ne.s32.totalorder %s157, %s160
      %p169 = scmp.eq.s32.totalorder %s19, 1
      %p170 = por %p168, %p169
      %p171 = scmp.ne.s32.totalorder %s160, %s161
      %p172 = scmp.eq.s32.totalorder %s19, 0
      %p173 = por %p171, %p172
      %p174 = scmp.ne.s32.totalorder %s160, %s161
      %p175 = scmp.eq.s32.totalorder %s20, 1
      %p176 = por %p174, %p175
      %p178 = scmp.ne.s32.totalorder %s161, %s177
      %p179 = scmp.eq.s32.totalorder %s20, 0
      %p180 = por %p178, %p179
      %p181 = scmp.le.s32.totalorder 1, %s14
      %p182 = scmp.lt.s32.totalorder %s14, 3
      %p183 = pnand %p181, %p182
      %p184 = pneg %p183
      // Predicated region
      $region9: #{tpu_custom_call.1} parent=5 // pred_check
        _
      $region10: #{tpu_custom_call.1} parent=5 // pred_check_branch
        %186 = sbr.rel (%p183) target = $region12
      $region11: #{tpu_custom_call.1} parent=5 // pred_region
        %s187 = ssub.s32 %s14, 1
        // Predicated region
        $region13: #{tpu_custom_call.1} parent=11 // pred_check
          %p188 = pneg %p103
        $region14: #{tpu_custom_call.1} parent=11 // pred_check_branch
          %190 = sbr.rel (%p188) target = $region16
        $region15: #{tpu_custom_call.1} parent=11 // pred_region
          _
        $region16: #{tpu_custom_call.1} parent=11 // pred_fallthru
          _
        // Predicated region
        $region17: #{tpu_custom_call.1} parent=11 // pred_check
          %p191 = pneg %p124
        $region18: #{tpu_custom_call.1} parent=11 // pred_check_branch
          %193 = sbr.rel (%p191) target = $region20
        $region19: #{tpu_custom_call.1} parent=11 // pred_region
          _
        $region20: #{tpu_custom_call.1} parent=11 // pred_fallthru
          _
        // Predicated region
        $region21: #{tpu_custom_call.1} parent=11 // pred_check
          %p194 = pneg %p145
        $region22: #{tpu_custom_call.1} parent=11 // pred_check_branch
          %196 = sbr.rel (%p194) target = $region24
        $region23: #{tpu_custom_call.1} parent=11 // pred_region
          _
        $region24: #{tpu_custom_call.1} parent=11 // pred_fallthru
          _
      $region12: #{tpu_custom_call.1} parent=5 // pred_fallthru
        _
      %p197 = scmp.lt.s32.totalorder %s14, 2
      // Predicated region
      $region25: #{tpu_custom_call.1} parent=5 // pred_check
        %p198 = pneg %p197
      $region26: #{tpu_custom_call.1} parent=5 // pred_check_branch
        %200 = sbr.rel (%p198) target = $region28
      $region27: #{tpu_custom_call.1} parent=5 // pred_region
        // Predicated region
        $region29: #{tpu_custom_call.1} parent=27 // pred_check
          %p201 = pneg %p48
        $region30: #{tpu_custom_call.1} parent=27 // pred_check_branch
          %203 = sbr.rel (%p201) target = $region32
        $region31: #{tpu_custom_call.1} parent=27 // pred_region
          %s204 = smul.u32 2, %s22
          %p205 = scmp.lt.s32.totalorder %s21, 1
          %s206 = scalar_select %p205, %s21, 1
          %p207 = scmp.lt.s32.totalorder %s204, 1
          %s208 = scalar_select %p207, %s204, 1
          %s209 = smul.addr %s206, 2
          %s210 = sadd.s32 %s208, %s209
          %s211 = smul.addr %s210, 4
          %s212 = scalar_lea.vmem %s0, %s211
          %s213 = smul.u32 2, %s22
        $region32: #{tpu_custom_call.1} parent=27 // pred_fallthru
          _
        // Predicated region
        $region33: #{tpu_custom_call.1} parent=27 // pred_check
          %p214 = pneg %p76
        $region34: #{tpu_custom_call.1} parent=27 // pred_check_branch
          %216 = sbr.rel (%p214) target = $region36
        $region35: #{tpu_custom_call.1} parent=27 // pred_region
          %s217 = smul.u32 2, %s22
          %p218 = scmp.lt.s32.totalorder %s21, 1
          %s219 = scalar_select %p218, %s21, 1
          %p220 = scmp.lt.s32.totalorder %s217, 1
          %s221 = scalar_select %p220, %s217, 1
          %s222 = smul.addr %s219, 2
          %s223 = sadd.s32 %s221, %s222
          %s224 = smul.addr %s223, 4
          %s225 = scalar_lea.vmem %s1, %s224
          %s226 = smul.u32 2, %s22
        $region36: #{tpu_custom_call.1} parent=27 // pred_fallthru
          _
      $region28: #{tpu_custom_call.1} parent=5 // pred_fallthru
        _
      %p227 = scmp.le.s32.totalorder 1, %s14
      %p228 = scmp.lt.s32.totalorder %s14, 3
      %p229 = pnand %p227, %p228
      %p230 = pneg %p229
      // Predicated region
      $region37: #{tpu_custom_call.1} parent=5 // pred_check
        _
      $region38: #{tpu_custom_call.1} parent=5 // pred_check_branch
        %232 = sbr.rel (%p229) target = $region40
      $region39: #{tpu_custom_call.1} parent=5 // pred_region
        %s233 = ssub.s32 %s14, 1
        %s234 = smul.u32 2, %s24
        %p235 = scmp.lt.s32.totalorder %s23, 1
        %s236 = scalar_select %p235, %s23, 1
        %p237 = scmp.lt.s32.totalorder %s234, 1
        %s238 = scalar_select %p237, %s234, 1
        %s239 = smul.addr %s236, 2
        %s240 = sadd.s32 %s238, %s239
        %s241 = smul.addr %s240, 4
        %s242 = scalar_lea.vmem %s0, %s241
        %p243 = pneg %p54
        %p244 = pneg %p51
        %s245 = smul.u32 2, %s24
        %p246 = scmp.lt.s32.totalorder %s23, 1
        %s247 = scalar_select %p246, %s23, 1
        %p248 = scmp.lt.s32.totalorder %s245, 1
        %s249 = scalar_select %p248, %s245, 1
        %s250 = smul.addr %s247, 2
        %s251 = sadd.s32 %s249, %s250
        %s252 = smul.addr %s251, 4
        %s253 = scalar_lea.vmem %s1, %s252
        %p254 = pneg %p82
        %p255 = pneg %p79
        %p256 = pneg %p103
        %p257 = pneg %p100
        %p258 = pneg %p124
        %p259 = pneg %p121
        %p260 = pneg %p145
        %p261 = pneg %p142
        %p262 = pneg %p173
        %p263 = pneg %p170
        %s264 = sand.u32 %s160, 1
        %s265 = scalar_lea.sflag [#allocation3], %s264
        %s266 = sand.u32 %s160, 1
        %s267 = smul.addr %s266, 16
        %s268 = scalar_lea.vmem [#allocation2], %s267
        %s269 = smul.u32 2, %s24
        %p270 = scmp.lt.s32.totalorder %s23, 1
        %s271 = scalar_select %p270, %s23, 1
        %p272 = scmp.lt.s32.totalorder %s269, 1
        %s273 = scalar_select %p272, %s269, 1
        %s274 = smul.addr %s271, 2
        %s275 = sadd.s32 %s273, %s274
        %s276 = smul.addr %s275, 4
        %s277 = scalar_lea.vmem %s0, %s276
        %s278 = smul.u32 2, %s24
        %s279 = smul.u32 2, %s24
        %p280 = scmp.lt.s32.totalorder %s23, 1
        %s281 = scalar_select %p280, %s23, 1
        %p282 = scmp.lt.s32.totalorder %s279, 1
        %s283 = scalar_select %p282, %s279, 1
        %s284 = smul.addr %s281, 2
        %s285 = sadd.s32 %s283, %s284
        %s286 = smul.addr %s285, 4
        %s287 = scalar_lea.vmem %s1, %s286
        %s288 = smul.u32 2, %s24
        %s289 = smul.u32 2, %s24
        %v290 = vld [vmem:[%s2] sm:$0xff]
        %v291 = vld [vmem:[%s277] sm:$0xff]
        %v292 = vld [vmem:[%s3] sm:$0xff]
        %v293 = vld [vmem:[%s287] sm:$0xff]
        %v295 = vcombine.high %v293, %v293
        %vm296 = vcmask 31744
        %v298 = vsel %vm296, %v292, 0
        %vm300 = vcmask 1043456
        %v301 = vsel %vm300, %v293, 0
        %v303 = vsel %vm300, %v295, 0
        %305 = vmatprep.subr.mxu0 %v303
        %306 = vmatpush1.msra.mxu0 %v301
        %307 = vmatprep.subr.mxu0 0.0
        %308 = vmatpush1.msra.mxu0 0.0
        %309 = vmatprep.subr.mxu0 0.0
        %310 = vmatpush1.msra.mxu0 0.0
        %311 = vmatprep.subr.mxu0 0.0
        %312 = vmatpush1.msra.mxu0 0.0
        %313 = vmatprep.subr.mxu0 0.0
        %314 = vmatpush1.msra.mxu0 0.0
        %315 = vmatprep.subr.mxu0 0.0
        %316 = vmatpush1.msra.mxu0 0.0
        %317 = vmatprep.subr.mxu0 0.0
        %318 = vmatpush1.msra.mxu0 0.0
        %319 = vmatprep.subr.mxu0 0.0
        %320 = vmatpush1.msra.mxu0 0.0
        %321 = vmatprep.subr.mxu0 0.0
        %322 = vmatpush1.msra.mxu0 0.0
        %323 = vmatprep.subr.mxu0 0.0
        %324 = vmatpush1.msra.mxu0 0.0
        %325 = vmatprep.subr.mxu0 0.0
        %326 = vmatpush1.msra.mxu0 0.0
        %327 = vmatprep.subr.mxu0 0.0
        %328 = vmatpush1.msra.mxu0 0.0
        %329 = vmatprep.subr.mxu0 0.0
        %330 = vmatpush1.msra.mxu0 0.0
        %331 = vmatprep.subr.mxu0 0.0
        %332 = vmatpush1.msra.mxu0 0.0
        %333 = vmatprep.subr.mxu0 0.0
        %334 = vmatpush1.msra.mxu0 0.0
        %335 = vmatprep.subr.mxu0 0.0
        %336 = vmatpush1.msra.mxu0 0.0
        %337 = vmatprep.subr.mxu0 0.0
        %338 = vmatpush1.msra.mxu0 0.0
        %339 = vmatprep.subr.mxu0 0.0
        %340 = vmatpush1.msra.mxu0 0.0
        %341 = vmatprep.subr.mxu0 0.0
        %342 = vmatpush1.msra.mxu0 0.0
        %343 = vmatprep.subr.mxu0 0.0
        %344 = vmatpush1.msra.mxu0 0.0
        %345 = vmatprep.subr.mxu0 0.0
        %346 = vmatpush1.msra.mxu0 0.0
        %347 = vmatprep.subr.mxu0 0.0
        %348 = vmatpush1.msra.mxu0 0.0
        %349 = vmatprep.subr.mxu0 0.0
        %350 = vmatpush1.msra.mxu0 0.0
        %351 = vmatprep.subr.mxu0 0.0
        %352 = vmatpush1.msra.mxu0 0.0
        %353 = vmatprep.subr.mxu0 0.0
        %354 = vmatpush1.msra.mxu0 0.0
        %355 = vmatprep.subr.mxu0 0.0
        %356 = vmatpush1.msra.mxu0 0.0
        %357 = vmatprep.subr.mxu0 0.0
        %358 = vmatpush1.msra.mxu0 0.0
        %359 = vmatprep.subr.mxu0 0.0
        %360 = vmatpush1.msra.mxu0 0.0
        %361 = vmatprep.subr.mxu0 0.0
        %362 = vmatpush1.msra.mxu0 0.0
        %363 = vmatprep.subr.mxu0 0.0
        %364 = vmatpush1.msra.mxu0 0.0
        %365 = vmatprep.subr.mxu0 0.0
        %366 = vmatpush1.msra.mxu0 0.0
        %367 = vmatprep.subr.mxu0 0.0
        %368 = vmatpush1.msra.mxu0 0.0
        %369 = vmatprep.mubr.f32.mxu0 0.0
        %370 = vmatmul.mubr.f32.gmra.mrb[0].mxu0 %v298
        %v371 = vpop.f32.mrb[0].mxu0
        %v372 = vadd.f32 0.0, %v371
        %v373 = vpop.f32.mrb[0].mxu0
        %v374 = vadd.f32 0.0, %v373
        %375 = vdwg.mxu0
        %v377 = vcombine.high %v291, %v291
        %v379 = vsel %vm296, %v290, 0
        %v381 = vsel %vm300, %v291, 0
        %v383 = vsel %vm300, %v377, 0
        %385 = vmatprep.subr.mxu0 %v383
        %386 = vmatpush1.msra.mxu0 %v381
        %387 = vmatprep.subr.mxu0 0.0
        %388 = vmatpush1.msra.mxu0 0.0
        %389 = vmatprep.subr.mxu0 0.0
        %390 = vmatpush1.msra.mxu0 0.0
        %391 = vmatprep.subr.mxu0 0.0
        %392 = vmatpush1.msra.mxu0 0.0
        %393 = vmatprep.subr.mxu0 0.0
        %394 = vmatpush1.msra.mxu0 0.0
        %395 = vmatprep.subr.mxu0 0.0
        %396 = vmatpush1.msra.mxu0 0.0
        %397 = vmatprep.subr.mxu0 0.0
        %398 = vmatpush1.msra.mxu0 0.0
        %399 = vmatprep.subr.mxu0 0.0
        %400 = vmatpush1.msra.mxu0 0.0
        %401 = vmatprep.subr.mxu0 0.0
        %402 = vmatpush1.msra.mxu0 0.0
        %403 = vmatprep.subr.mxu0 0.0
        %404 = vmatpush1.msra.mxu0 0.0
        %405 = vmatprep.subr.mxu0 0.0
        %406 = vmatpush1.msra.mxu0 0.0
        %407 = vmatprep.subr.mxu0 0.0
        %408 = vmatpush1.msra.mxu0 0.0
        %409 = vmatprep.subr.mxu0 0.0
        %410 = vmatpush1.msra.mxu0 0.0
        %411 = vmatprep.subr.mxu0 0.0
        %412 = vmatpush1.msra.mxu0 0.0
        %413 = vmatprep.subr.mxu0 0.0
        %414 = vmatpush1.msra.mxu0 0.0
        %415 = vmatprep.subr.mxu0 0.0
        %416 = vmatpush1.msra.mxu0 0.0
        %417 = vmatprep.subr.mxu0 0.0
        %418 = vmatpush1.msra.mxu0 0.0
        %419 = vmatprep.subr.mxu0 0.0
        %420 = vmatpush1.msra.mxu0 0.0
        %421 = vmatprep.subr.mxu0 0.0
        %422 = vmatpush1.msra.mxu0 0.0
        %423 = vmatprep.subr.mxu0 0.0
        %424 = vmatpush1.msra.mxu0 0.0
        %425 = vmatprep.subr.mxu0 0.0
        %426 = vmatpush1.msra.mxu0 0.0
        %427 = vmatprep.subr.mxu0 0.0
        %428 = vmatpush1.msra.mxu0 0.0
        %429 = vmatprep.subr.mxu0 0.0
        %430 = vmatpush1.msra.mxu0 0.0
        %431 = vmatprep.subr.mxu0 0.0
        %432 = vmatpush1.msra.mxu0 0.0
        %433 = vmatprep.subr.mxu0 0.0
        %434 = vmatpush1.msra.mxu0 0.0
        %435 = vmatprep.subr.mxu0 0.0
        %436 = vmatpush1.msra.mxu0 0.0
        %437 = vmatprep.subr.mxu0 0.0
        %438 = vmatpush1.msra.mxu0 0.0
        %439 = vmatprep.subr.mxu0 0.0
        %440 = vmatpush1.msra.mxu0 0.0
        %441 = vmatprep.subr.mxu0 0.0
        %442 = vmatpush1.msra.mxu0 0.0
        %443 = vmatprep.subr.mxu0 0.0
        %444 = vmatpush1.msra.mxu0 0.0
        %445 = vmatprep.subr.mxu0 0.0
        %446 = vmatpush1.msra.mxu0 0.0
        %447 = vmatprep.subr.mxu0 0.0
        %448 = vmatpush1.msra.mxu0 0.0
        %449 = vmatprep.mubr.f32.mxu0 0.0
        %450 = vmatmul.mubr.f32.gmra.mrb[0].mxu0 %v379
        %v451 = vpop.f32.mrb[0].mxu0
        %v452 = vadd.f32 %v372, %v451
        %v453 = vpop.f32.mrb[0].mxu0
        %v454 = vadd.f32 %v374, %v453
        %455 = vdwg.mxu0
        %v456 = vld [vmem:[%s4] sm:$0xff]
        %458 = vset.pattern.permute.xlu0 0
        %459 = vperm.xlu0 %458, %v456
        %v460 = vpop.permute.xlu0 %459
        %v462 = vadd.f32 %v452, %v460
        %v463 = vadd.f32 %v454, %v460
        %464 = vst [vmem:[%s268] sm:$0xff] %v462
        %465 = vst [vmem:[%s268 + $0x8] sm:$0xff] %v463
        %s466 = sand.u32 %s160, 1
        %s467 = scalar_lea.sflag [#allocation3], %s466
        %s468 = sand.u32 %s160, 1
        %s469 = smul.addr %s468, 16
        %s470 = scalar_lea.vmem [#allocation2], %s469
        // Predicated region
        $region41: #{tpu_custom_call.1} parent=39 // pred_check
          %p471 = pneg %p170
        $region42: #{tpu_custom_call.1} parent=39 // pred_check_branch
          %473 = sbr.rel (%p471) target = $region44
        $region43: #{tpu_custom_call.1} parent=39 // pred_region
          %s474 = smul.u32 2, %s24
          %s476 = ssub.s32 256, 256
          %477 = vsyncadd %s467, %s476
          %s478 = smul.addr %s23, 2
          %s479 = sadd.s32 %s474, %s478
          %s480 = smul.addr %s479, 128
          %s481 = scalar_lea.hbm %s5, %s480
          %s483 = sshll.u32 %s470, 4
          %s484 = int_to_ptr.vmem [resolvable:$true] %s483
          %486 = dma.vmem_to_hbm [thread:$0]  %s484, 256, %s481, %s467
        $region44: #{tpu_custom_call.1} parent=39 // pred_fallthru
          _
      $region40: #{tpu_custom_call.1} parent=5 // pred_fallthru
        _
      %p487 = scmp.le.s32.totalorder 2, %s14
      // Predicated region
      $region45: #{tpu_custom_call.1} parent=5 // pred_check
        %p488 = pneg %p487
      $region46: #{tpu_custom_call.1} parent=5 // pred_check_branch
        %490 = sbr.rel (%p488) target = $region48
      $region47: #{tpu_custom_call.1} parent=5 // pred_region
        %s491 = ssub.s32 %s14, 2
        // Predicated region
        $region49: #{tpu_custom_call.1} parent=47 // pred_check
          %p492 = pneg %p176
        $region50: #{tpu_custom_call.1} parent=47 // pred_check_branch
          %494 = sbr.rel (%p492) target = $region52
        $region51: #{tpu_custom_call.1} parent=47 // pred_region
          %s495 = sand.u32 %s161, 1
          %s496 = scalar_lea.sflag [#allocation3], %s495
          %s497 = sand.u32 %s161, 1
          %s498 = smul.addr %s497, 16
          %s499 = scalar_lea.vmem [#allocation2], %s498
          %500 = dma.done %s496, 256
        $region52: #{tpu_custom_call.1} parent=47 // pred_fallthru
          _
      $region48: #{tpu_custom_call.1} parent=5 // pred_fallthru
        _
    $region6: #{tpu_custom_call.1} parent=1 // loop_footer
      %s18 = sadd.s32 1, %s14
    $region7: #{tpu_custom_call.1} parent=1 // loop_footer_branch
      %13 = sbr.rel target = $region3
    $region8: #{tpu_custom_call.1} parent=1 // loop_exit
      _
    %501 = vsyncpa [#allocation3], 1
    %s502 = scalar_lea.sflag [#allocation3], 1
    %503 = vsyncpa %s502, 1

</llo_original>
